<compile_context>
chip_gen: v7x
topology: tpu7x:2x2x1
jax: 0.10.0
libtpu: 0.0.40
codegen_flags: <defaults>
</compile_context>

<pallas_src>
import functools

import jax
import jax.numpy as jnp
from jax import lax
from jax.experimental import pallas as pl
from jax.experimental.pallas import tpu as pltpu


_OUT_LANES = 8  # lane-padded fused output: [loss, chosen_reward, rejected_reward, 0...]


def _dpo_kernel(need_s_mask, seq_len, seq_tile,
                beta_ref,
                lp_ac_ref, lp_ar_ref, lp_rc_ref, lp_rr_ref,
                cmask_ref, rmask_ref,
                out_ref, sc_acc, sr_acc):
    f32 = jnp.float32
    k = pl.program_id(1)

    @pl.when(k == 0)
    def _():
        sc_acc[...] = jnp.zeros_like(sc_acc)
        sr_acc[...] = jnp.zeros_like(sr_acc)

    cmask = cmask_ref[...].astype(f32)
    rmask = rmask_ref[...].astype(f32)

    # Algebraic fusion: (actor - ref) per token, masked; one lane reduction per
    # (chosen, rejected) pair instead of four.
    dc = (lp_ac_ref[...].astype(f32) - lp_rc_ref[...].astype(f32)) * cmask
    dr = (lp_ar_ref[...].astype(f32) - lp_rr_ref[...].astype(f32)) * rmask

    if need_s_mask:
        # Ragged last S block: zero out padded (out-of-range) token columns.
        # Use a select so garbage/NaN padding cannot propagate into the sums.
        tok = k * seq_tile + lax.broadcasted_iota(jnp.int32, dc.shape, 1)
        valid = tok < seq_len
        dc = jnp.where(valid, dc, 0.0)
        dr = jnp.where(valid, dr, 0.0)

    sc_acc[...] += jnp.sum(dc, axis=-1, keepdims=True)   # sum(ac*m) - sum(rc*m)
    sr_acc[...] += jnp.sum(dr, axis=-1, keepdims=True)   # sum(ar*m) - sum(rr*m)

    @pl.when(k == pl.num_programs(1) - 1)
    def _():
        beta = beta_ref[0]
        sc = sc_acc[...]
        sr = sr_acc[...]
        logits = sc - sr                      # pi_logratios - ref_logratios
        y = -beta * logits
        # losses = -logsigmoid(beta*logits) = softplus(-beta*logits), stable form.
        loss = jnp.maximum(y, 0.0) + jnp.log1p(jnp.exp(-jnp.abs(y)))
        pad = jnp.zeros((loss.shape[0], _OUT_LANES - 3), f32)
        out_ref[...] = jnp.concatenate([loss, beta * sc, beta * sr, pad], axis=-1)


def _vmem_capacity_bytes():
    try:
        return int(pltpu.get_tpu_info().vmem_capacity_bytes)
    except Exception:
        return 64 << 20   # conservative fallback (v7x per-TC physical VMEM)


def _is_v7x():
    try:
        kind = jax.devices()[0].device_kind.lower()
    except Exception:
        return False
    return ("v7" in kind) or ("7x" in kind)


def _pick_tiles(B, S, itemsize_sum, min_itemsize, input_budget):
    """Pick (batch_tile, seq_tile) for (B, S) token-streamed inputs."""
    # VMEM bytes per (row, token) per grid step:
    #   6 double-buffered input tiles + ~4 f32 temporaries (cmask, rmask, dc, dr).
    per_token = 2 * itemsize_sum + 4 * 4
    # Sublane-packing alignment: 8 rows (f32), 16 (bf16), 32 (int8 / bool).
    align = (4 // max(int(min_itemsize), 1)) * 8

    def round_tb(tb):
        tb = int(max(1, min(tb, B)))
        if tb >= B:
            return B                      # full-batch block (exempt from /8 rule)
        if tb >= align:
            return (tb // align) * align
        return max(8, (tb // 8) * 8) if tb >= 8 else 8

    # Prefer a single full-S block if it still allows a decent batch tile.
    tb_full = input_budget // max(per_token * S, 1)
    if tb_full >= min(B, 256):
        return round_tb(tb_full), S

    # Otherwise tile S so the batch tile can sit near the 256-row sweet spot.
    tb = round_tb(min(256, B))
    ts = input_budget // max(per_token * tb, 1)
    ts = min(S, max(128, (ts // 128) * 128))
    return tb, ts


def dpo_loss(logprob_actor_chosen, logprob_actor_reject,
             logprob_ref_chosen, logprob_ref_reject,
             chosen_mask, reject_mask, beta=0.1,
             batch_block=None, seq_block=None):
    """Returns (losses, chosen_rewards, rejected_rewards), each shape (B,).

    Logprobs may be f32 or bf16; masks may be f32 / bf16 / int8 / bool (they
    are cast to f32 inside VMEM, so narrow masks only shrink the HBM stream).
    batch_block / seq_block override the auto tile choice (testing / tuning).
    """
    B, S = logprob_actor_chosen.shape
    f32 = jnp.float32

    streams = (logprob_actor_chosen, logprob_actor_reject,
               logprob_ref_chosen, logprob_ref_reject,
               chosen_mask, reject_mask)

    itemsize_sum = sum(int(a.dtype.itemsize) for a in streams)
    min_itemsize = min(int(a.dtype.itemsize) for a in streams)

    # Generation-aware budgets (v5e/v6e: 128 MiB, v7x: 64 MiB per TC).
    vmem_cap = _vmem_capacity_bytes()
    input_budget = min(24 << 20, max(8 << 20, vmem_cap // 3))
    vmem_limit = min(96 << 20, (vmem_cap * 3) // 4)

    tb, ts = _pick_tiles(B, S, itemsize_sum, min_itemsize, input_budget)
    if batch_block is not None:
        tb = min(int(batch_block), B)
    if seq_block is not None:
        ts = min(int(seq_block), S)

    nb = pl.cdiv(B, tb)
    ns = pl.cdiv(S, ts)
    need_s_mask = (S % ts) != 0

    kernel = functools.partial(_dpo_kernel, bool(need_s_mask), int(S), int(ts))

    in_spec = pl.BlockSpec((tb, ts), lambda i, k: (i, k))
    beta_spec = pl.BlockSpec(memory_space=pltpu.MemorySpace.SMEM)
    out_spec = pl.BlockSpec((tb, _OUT_LANES), lambda i, k: (i, 0))

    # Only v7x has 2 TensorCores per chip; CORE_PARALLEL shards the batch axis
    # across them.  On 1-TC chips, parallel/arbitrary make no measured
    # difference, so keep ARBITRARY there.
    batch_sem = pltpu.CORE_PARALLEL if _is_v7x() else pltpu.ARBITRARY

    out = pl.pallas_call(
        kernel,
        grid=(nb, ns),
        out_shape=jax.ShapeDtypeStruct((B, _OUT_LANES), f32),
        in_specs=[beta_spec] + [in_spec] * 6,
        out_specs=out_spec,
        scratch_shapes=[pltpu.VMEM((tb, 1), f32),
                        pltpu.VMEM((tb, 1), f32)],
        compiler_params=pltpu.CompilerParams(
            dimension_semantics=(batch_sem, pltpu.ARBITRARY),
            vmem_limit_bytes=int(vmem_limit)),
    )(jnp.asarray([beta], f32), *streams)

    return out[:, 0], out[:, 1], out[:, 2]


def _reference(lp_ac, lp_ar, lp_rc, lp_rr, cmask, rmask, beta=0.1):
    f32 = jnp.float32
    cmask = cmask.astype(f32)
    rmask = rmask.astype(f32)
    lp_ac = lp_ac.astype(f32) * cmask
    lp_ar = lp_ar.astype(f32) * rmask
    lp_rc = lp_rc.astype(f32) * cmask
    lp_rr = lp_rr.astype(f32) * rmask
    ref_logratios = lp_rc.sum(-1) - lp_rr.sum(-1)
    pi_logratios = lp_ac.sum(-1) - lp_ar.sum(-1)
    logits = pi_logratios - ref_logratios
    losses = -jax.nn.log_sigmoid(beta * logits)
    chosen_rewards = beta * (lp_ac.sum(-1) - lp_rc.sum(-1))
    rejected_rewards = beta * (lp_ar.sum(-1) - lp_rr.sum(-1))
    return losses, chosen_rewards, rejected_rewards


def _run_case(key, B, S, lp_dtype, mask_dtype, beta=0.1, atol=1e-4,
              batch_block=None, seq_block=None):
    ks = jax.random.split(key, 6)
    # per-token log-probabilities are negative
    lp_ac = -jnp.abs(jax.random.normal(ks[0], (B, S), jnp.float32)).astype(lp_dtype)
    lp_ar = -jnp.abs(jax.random.normal(ks[1], (B, S), jnp.float32)).astype(lp_dtype)
    lp_rc = -jnp.abs(jax.random.normal(ks[2], (B, S), jnp.float32)).astype(lp_dtype)
    lp_rr = -jnp.abs(jax.random.normal(ks[3], (B, S), jnp.float32)).astype(lp_dtype)
    cmask = (jax.random.uniform(ks[4], (B, S)) > 0.3).astype(mask_dtype)
    rmask = (jax.random.uniform(ks[5], (B, S)) > 0.3).astype(mask_dtype)

    losses, chosen_r, reject_r = dpo_loss(lp_ac, lp_ar, lp_rc, lp_rr,
                                          cmask, rmask, beta=beta,
                                          batch_block=batch_block,
                                          seq_block=seq_block)
    jax.block_until_ready((losses, chosen_r, reject_r))

    ref_losses, ref_cr, ref_rr = _reference(lp_ac, lp_ar, lp_rc, lp_rr,
                                            cmask, rmask, beta=beta)
    assert jnp.allclose(losses, ref_losses, atol=atol, rtol=atol), (losses, ref_losses)
    assert jnp.allclose(chosen_r, ref_cr, atol=atol, rtol=atol), (chosen_r, ref_cr)
    assert jnp.allclose(reject_r, ref_rr, atol=atol, rtol=atol), (reject_r, ref_rr)


if __name__ == "__main__":
    key = jax.random.PRNGKey(0)
    k1, k2, k3 = jax.random.split(key, 3)

    # bf16 logprobs + bf16 masks, tiny full-block case.
    _run_case(k1, B=2, S=8, lp_dtype=jnp.bfloat16, mask_dtype=jnp.bfloat16)

    # f32 everything, forced small batch tile -> boundary batch blocks.
    _run_case(k2, B=20, S=128, lp_dtype=jnp.float32, mask_dtype=jnp.float32,
              batch_block=8)

    # bf16 logprobs + int8 masks, forced S tiling with a ragged last S block
    # -> exercises the accumulator init/finalize path and the validity mask.
    _run_case(k3, B=4, S=200, lp_dtype=jnp.bfloat16, mask_dtype=jnp.int8,
              seq_block=128)

    print("KERNEL_OK")
</pallas_src>

<mosaic_0001>
module attributes {stable_mosaic.version = 11 : i64} {
  func.func @_dpo_kernel(%arg0: i32, %arg1: i32, %arg2: memref<1xf32, #tpu.memory_space<smem>>, %arg3: memref<2x8xbf16, #tpu.memory_space<vmem>>, %arg4: memref<2x8xbf16, #tpu.memory_space<vmem>>, %arg5: memref<2x8xbf16, #tpu.memory_space<vmem>>, %arg6: memref<2x8xbf16, #tpu.memory_space<vmem>>, %arg7: memref<2x8xbf16, #tpu.memory_space<vmem>>, %arg8: memref<2x8xbf16, #tpu.memory_space<vmem>>, %arg9: memref<2x8xf32, #tpu.memory_space<vmem>>, %arg10: memref<2x1xf32, #tpu.memory_space<vmem>>, %arg11: memref<2x1xf32, #tpu.memory_space<vmem>>) attributes {dimension_semantics = [#tpu.dimension_semantics<arbitrary>, #tpu.dimension_semantics<arbitrary>], iteration_bounds = array<i64: 1, 1>, scalar_prefetch = 0 : i64, scratch_operands = 2 : i64, tpu.core_type = #tpu.core_type<tc>, window_params = [{transform_indices = @transform_0, window_bounds = array<i64: 1>}, {transform_indices = @transform_1, window_bounds = array<i64: 2, 8>}, {transform_indices = @transform_2, window_bounds = array<i64: 2, 8>}, {transform_indices = @transform_3, window_bounds = array<i64: 2, 8>}, {transform_indices = @transform_4, window_bounds = array<i64: 2, 8>}, {transform_indices = @transform_5, window_bounds = array<i64: 2, 8>}, {transform_indices = @transform_6, window_bounds = array<i64: 2, 8>}, {transform_indices = @transform_7, window_bounds = array<i64: 2, 8>}]} {
    %c0_i32 = arith.constant 0 : i32
    %0 = arith.cmpi eq, %arg1, %c0_i32 : i32
    %1 = arith.extui %0 : i1 to i32
    %c0_i32_0 = arith.constant 0 : i32
    %2 = arith.cmpi ne, %1, %c0_i32_0 : i32
    scf.if %2 {
      %cst_23 = arith.constant 0.000000e+00 : f32
      %32 = vector.broadcast %cst_23 : f32 to vector<2x1xf32>
      %c0_24 = arith.constant 0 : index
      %c0_25 = arith.constant 0 : index
      %33 = vector.load %arg10[%c0_24, %c0_25] : memref<2x1xf32, #tpu.memory_space<vmem>>, vector<2x1xf32>
      tpu.vector_store %arg10[%c0_24, %c0_25], %32 {strides = array<i32>} : memref<2x1xf32, #tpu.memory_space<vmem>>, vector<2x1xf32>,
      %cst_26 = arith.constant 0.000000e+00 : f32
      %34 = vector.broadcast %cst_26 : f32 to vector<2x1xf32>
      %c0_27 = arith.constant 0 : index
      %c0_28 = arith.constant 0 : index
      %35 = vector.load %arg11[%c0_27, %c0_28] : memref<2x1xf32, #tpu.memory_space<vmem>>, vector<2x1xf32>
      tpu.vector_store %arg11[%c0_27, %c0_28], %34 {strides = array<i32>} : memref<2x1xf32, #tpu.memory_space<vmem>>, vector<2x1xf32>,
    } else {
    }
    %c0 = arith.constant 0 : index
    %c0_1 = arith.constant 0 : index
    %3 = vector.load %arg7[%c0, %c0_1] : memref<2x8xbf16, #tpu.memory_space<vmem>>, vector<2x8xbf16>
    %4 = arith.extf %3 : vector<2x8xbf16> to vector<2x8xf32>
    %c0_2 = arith.constant 0 : index
    %c0_3 = arith.constant 0 : index
    %5 = vector.load %arg8[%c0_2, %c0_3] : memref<2x8xbf16, #tpu.memory_space<vmem>>, vector<2x8xbf16>
    %6 = arith.extf %5 : vector<2x8xbf16> to vector<2x8xf32>
    %c0_4 = arith.constant 0 : index
    %c0_5 = arith.constant 0 : index
    %7 = vector.load %arg3[%c0_4, %c0_5] : memref<2x8xbf16, #tpu.memory_space<vmem>>, vector<2x8xbf16>
    %8 = arith.extf %7 : vector<2x8xbf16> to vector<2x8xf32>
    %c0_6 = arith.constant 0 : index
    %c0_7 = arith.constant 0 : index
    %9 = vector.load %arg5[%c0_6, %c0_7] : memref<2x8xbf16, #tpu.memory_space<vmem>>, vector<2x8xbf16>
    %10 = arith.extf %9 : vector<2x8xbf16> to vector<2x8xf32>
    %11 = arith.subf %8, %10 : vector<2x8xf32>
    %12 = arith.mulf %11, %4 : vector<2x8xf32>
    %c0_8 = arith.constant 0 : index
    %c0_9 = arith.constant 0 : index
    %13 = vector.load %arg4[%c0_8, %c0_9] : memref<2x8xbf16, #tpu.memory_space<vmem>>, vector<2x8xbf16>
    %14 = arith.extf %13 : vector<2x8xbf16> to vector<2x8xf32>
    %c0_10 = arith.constant 0 : index
    %c0_11 = arith.constant 0 : index
    %15 = vector.load %arg6[%c0_10, %c0_11] : memref<2x8xbf16, #tpu.memory_space<vmem>>, vector<2x8xbf16>
    %16 = arith.extf %15 : vector<2x8xbf16> to vector<2x8xf32>
    %17 = arith.subf %14, %16 : vector<2x8xf32>
    %18 = arith.mulf %17, %6 : vector<2x8xf32>
    %c0_12 = arith.constant 0 : index
    %c0_13 = arith.constant 0 : index
    %19 = vector.load %arg10[%c0_12, %c0_13] : memref<2x1xf32, #tpu.memory_space<vmem>>, vector<2x1xf32>
    %cst = arith.constant dense<0.000000e+00> : vector<2xf32>
    %20 = vector.multi_reduction <add>, %12, %cst [1] : vector<2x8xf32> to vector<2xf32>
    %21 = vector.shape_cast %20 : vector<2xf32> to vector<2x1xf32>
    %22 = arith.addf %19, %21 : vector<2x1xf32>
    %c0_14 = arith.constant 0 : index
    %c0_15 = arith.constant 0 : index
    %23 = vector.load %arg10[%c0_14, %c0_15] : memref<2x1xf32, #tpu.memory_space<vmem>>, vector<2x1xf32>
    tpu.vector_store %arg10[%c0_14, %c0_15], %22 {strides = array<i32>} : memref<2x1xf32, #tpu.memory_space<vmem>>, vector<2x1xf32>,
    %c0_16 = arith.constant 0 : index
    %c0_17 = arith.constant 0 : index
    %24 = vector.load %arg11[%c0_16, %c0_17] : memref<2x1xf32, #tpu.memory_space<vmem>>, vector<2x1xf32>
    %cst_18 = arith.constant dense<0.000000e+00> : vector<2xf32>
    %25 = vector.multi_reduction <add>, %18, %cst_18 [1] : vector<2x8xf32> to vector<2xf32>
    %26 = vector.shape_cast %25 : vector<2xf32> to vector<2x1xf32>
    %27 = arith.addf %24, %26 : vector<2x1xf32>
    %c0_19 = arith.constant 0 : index
    %c0_20 = arith.constant 0 : index
    %28 = vector.load %arg11[%c0_19, %c0_20] : memref<2x1xf32, #tpu.memory_space<vmem>>, vector<2x1xf32>
    tpu.vector_store %arg11[%c0_19, %c0_20], %27 {strides = array<i32>} : memref<2x1xf32, #tpu.memory_space<vmem>>, vector<2x1xf32>,
    %c0_i32_21 = arith.constant 0 : i32
    %29 = arith.cmpi eq, %arg1, %c0_i32_21 : i32
    %30 = arith.extui %29 : i1 to i32
    %c0_i32_22 = arith.constant 0 : i32
    %31 = arith.cmpi ne, %30, %c0_i32_22 : i32
    scf.if %31 {
      %c0_23 = arith.constant 0 : index
      %32 = memref.load %arg2[%c0_23] : memref<1xf32, #tpu.memory_space<smem>>
      %c0_24 = arith.constant 0 : index
      %c0_25 = arith.constant 0 : index
      %33 = vector.load %arg10[%c0_24, %c0_25] : memref<2x1xf32, #tpu.memory_space<vmem>>, vector<2x1xf32>
      %c0_26 = arith.constant 0 : index
      %c0_27 = arith.constant 0 : index
      %34 = vector.load %arg11[%c0_26, %c0_27] : memref<2x1xf32, #tpu.memory_space<vmem>>, vector<2x1xf32>
      %35 = arith.subf %33, %34 : vector<2x1xf32>
      %cst_28 = arith.constant 0.000000e+00 : f32
      %36 = arith.subf %cst_28, %32 : f32
      %37 = vector.broadcast %36 : f32 to vector<2x1xf32>
      %38 = arith.mulf %37, %35 : vector<2x1xf32>
      %cst_29 = arith.constant 0.000000e+00 : f32
      %39 = vector.broadcast %cst_29 : f32 to vector<2x1xf32>
      %40 = arith.maximumf %38, %39 : vector<2x1xf32>
      %41 = math.absf %38 : vector<2x1xf32>
      %cst_30 = arith.constant 0.000000e+00 : f32
      %42 = vector.broadcast %cst_30 : f32 to vector<2x1xf32>
      %43 = arith.subf %42, %41 : vector<2x1xf32>
      %44 = math.exp %43 : vector<2x1xf32>
      %45 = math.log1p %44 : vector<2x1xf32>
      %46 = arith.addf %40, %45 : vector<2x1xf32>
      %cst_31 = arith.constant 0.000000e+00 : f32
      %47 = vector.broadcast %cst_31 : f32 to vector<2x5xf32>
      %48 = vector.broadcast %32 : f32 to vector<2x1xf32>
      %49 = arith.mulf %48, %33 : vector<2x1xf32>
      %50 = vector.broadcast %32 : f32 to vector<2x1xf32>
      %51 = arith.mulf %50, %34 : vector<2x1xf32>
      %52 = tpu.concatenate %46, %49, %51, %47 in 1 : vector<2x1xf32>, vector<2x1xf32>, vector<2x1xf32>, vector<2x5xf32> -> vector<2x8xf32>
      %c0_32 = arith.constant 0 : index
      %c0_33 = arith.constant 0 : index
      %53 = vector.load %arg9[%c0_32, %c0_33] : memref<2x8xf32, #tpu.memory_space<vmem>>, vector<2x8xf32>
      tpu.vector_store %arg9[%c0_32, %c0_33], %52 {strides = array<i32>} : memref<2x8xf32, #tpu.memory_space<vmem>>, vector<2x8xf32>,
    } else {
    }
    return
  }
  func.func @transform_0(%arg0: i32, %arg1: i32) -> i32 {
    %c0_i32 = arith.constant 0 : i32
    %c0_i32_0 = arith.constant 0 : i32
    return %c0_i32 : i32
  }
  func.func @transform_1(%arg0: i32, %arg1: i32) -> (i32, i32) {
    %c0_i32 = arith.constant 0 : i32
    return %arg0, %arg1 : i32, i32
  }
  func.func @transform_2(%arg0: i32, %arg1: i32) -> (i32, i32) {
    %c0_i32 = arith.constant 0 : i32
    return %arg0, %arg1 : i32, i32
  }
  func.func @transform_3(%arg0: i32, %arg1: i32) -> (i32, i32) {
    %c0_i32 = arith.constant 0 : i32
    return %arg0, %arg1 : i32, i32
  }
  func.func @transform_4(%arg0: i32, %arg1: i32) -> (i32, i32) {
    %c0_i32 = arith.constant 0 : i32
    return %arg0, %arg1 : i32, i32
  }
  func.func @transform_5(%arg0: i32, %arg1: i32) -> (i32, i32) {
    %c0_i32 = arith.constant 0 : i32
    return %arg0, %arg1 : i32, i32
  }
  func.func @transform_6(%arg0: i32, %arg1: i32) -> (i32, i32) {
    %c0_i32 = arith.constant 0 : i32
    return %arg0, %arg1 : i32, i32
  }
  func.func @transform_7(%arg0: i32, %arg1: i32) -> (i32, i32) {
    %c0_i32 = arith.constant 0 : i32
    %c0_i32_0 = arith.constant 0 : i32
    return %arg0, %c0_i32 : i32, i32
  }
}

</mosaic_0001>

<llo_original>
// kernel: tpu_custom_call.1
$region0: #{tpu_custom_call.1}
  #allocation0 [shape = 'u32[]', space=smem, size = 0x4, offset = 0x4, fixed_abs, tag = 'smem constant byte address 0x4 - core index']
  #allocation1 [shape = 'u32[144,128]{1,0:T(1,128)}', space=vmem, size = 0x12000, scoped, tag = 'internal scratch']
  #allocation2 [shape = 'f32[2,1]{1,0:T(2,128)}', space=vmem, size = 0x400, scoped, tag = 'scratch operand']
  #allocation3 [shape = 'f32[2,1]{1,0:T(2,128)}', space=vmem, size = 0x400, scoped, tag = 'scratch operand']
  #allocation4 [shape = 'f32[1]{0:T(128)S(6)}', space=smem, size = 0x200, scoped, tag = 'scoped memory for tpu_custom_call.1']
  %s0 = inlined_call_operand.<no memory space> [shape: f32[1], index: 0, kind: input, shape index: {}]
  %s1 = inlined_call_operand.vmem [shape: bf16[2,8], index: 1, kind: input, shape index: {}]
  %s2 = inlined_call_operand.vmem [shape: bf16[2,8], index: 2, kind: input, shape index: {}]
  %s3 = inlined_call_operand.vmem [shape: bf16[2,8], index: 3, kind: input, shape index: {}]
  %s4 = inlined_call_operand.vmem [shape: bf16[2,8], index: 4, kind: input, shape index: {}]
  %s5 = inlined_call_operand.vmem [shape: bf16[2,8], index: 5, kind: input, shape index: {}]
  %s6 = inlined_call_operand.vmem [shape: bf16[2,8], index: 6, kind: input, shape index: {}]
  %s7 = inlined_call_operand.hbm [shape: f32[2,8], index: 7, kind: output, shape index: {}]
  %s8 = sld [smem:[#allocation0]]
  $region46: #{tpu_custom_call.1} parent=0
    _
  %s10 = ssub.s32 1, %s8
  %s11 = scalar_select 0, %s10, %s8
  %12 = sst [smem:[#allocation4]] %s0
  $region1: #{tpu_custom_call.1} parent=0
    #allocation5 [shape = 'u8[1024]{0}', space=vmem, size = 0x400, scoped, tag = 'output window, operand 0, single buffered']
    #allocation6 [shape = 's32[1]{0}', space=sflag, size = 0x4, scoped, tag = 'scoped memory for tpu_custom_call.1']
    %13 = vsyncpa [#allocation6], 0
    // Predicated region
    $region2: #{tpu_custom_call.1} parent=1 // pred_check
      _
    $region3: #{tpu_custom_call.1} parent=1 // pred_check_branch
      %15 = sbr.rel (0) target = $region5
    $region4: #{tpu_custom_call.1} parent=1 // pred_region
      _
    $region5: #{tpu_custom_call.1} parent=1 // pred_fallthru
      _
    // Predicated region
    $region6: #{tpu_custom_call.1} parent=1 // pred_check
      _
    $region7: #{tpu_custom_call.1} parent=1 // pred_check_branch
      %17 = sbr.rel (0) target = $region9
    $region8: #{tpu_custom_call.1} parent=1 // pred_region
      _
    $region9: #{tpu_custom_call.1} parent=1 // pred_fallthru
      _
    // Predicated region
    $region10: #{tpu_custom_call.1} parent=1 // pred_check
      _
    $region11: #{tpu_custom_call.1} parent=1 // pred_check_branch
      %19 = sbr.rel (0) target = $region13
    $region12: #{tpu_custom_call.1} parent=1 // pred_region
      _
    $region13: #{tpu_custom_call.1} parent=1 // pred_fallthru
      _
    // Predicated region
    $region14: #{tpu_custom_call.1} parent=1 // pred_check
      _
    $region15: #{tpu_custom_call.1} parent=1 // pred_check_branch
      %21 = sbr.rel (0) target = $region17
    $region16: #{tpu_custom_call.1} parent=1 // pred_region
      _
    $region17: #{tpu_custom_call.1} parent=1 // pred_fallthru
      _
    // Predicated region
    $region18: #{tpu_custom_call.1} parent=1 // pred_check
      _
    $region19: #{tpu_custom_call.1} parent=1 // pred_check_branch
      %23 = sbr.rel (0) target = $region21
    $region20: #{tpu_custom_call.1} parent=1 // pred_region
      _
    $region21: #{tpu_custom_call.1} parent=1 // pred_fallthru
      _
    // Predicated region
    $region22: #{tpu_custom_call.1} parent=1 // pred_check
      _
    $region23: #{tpu_custom_call.1} parent=1 // pred_check_branch
      %25 = sbr.rel (0) target = $region25
    $region24: #{tpu_custom_call.1} parent=1 // pred_region
      _
    $region25: #{tpu_custom_call.1} parent=1 // pred_fallthru
      _
    // Predicated region
    $region26: #{tpu_custom_call.1} parent=1 // pred_check
      _
    $region27: #{tpu_custom_call.1} parent=1 // pred_check_branch
      %27 = sbr.rel (0) target = $region29
    $region28: #{tpu_custom_call.1} parent=1 // pred_region
      _
    $region29: #{tpu_custom_call.1} parent=1 // pred_fallthru
      _
    %p28 = scmp.eq.s32.totalorder 0, 0
    // Predicated region
    $region30: #{tpu_custom_call.1} parent=1 // pred_check
      %p29 = pneg %p28
    $region31: #{tpu_custom_call.1} parent=1 // pred_check_branch
      %31 = sbr.rel (%p29) target = $region33
    $region32: #{tpu_custom_call.1} parent=1 // pred_region
      %vm32 = vcmask 1024
      %33 = vst.msk [vmem:[#allocation2] sm:$0x3] %vm32, 0.0
      %34 = vst.msk [vmem:[#allocation3] sm:$0x3] %vm32, 0.0
    $region33: #{tpu_custom_call.1} parent=1 // pred_fallthru
      _
    %v35 = vld [vmem:[%s5] sm:$0x1]
    %v36 = vunpack.c.l.bf16 %v35
    %v37 = vld [vmem:[%s6] sm:$0x1]
    %v38 = vunpack.c.l.bf16 %v37
    %v39 = vld [vmem:[%s1] sm:$0x1]
    %v40 = vunpack.c.l.bf16 %v39
    %v41 = vld [vmem:[%s3] sm:$0x1]
    %v42 = vunpack.c.l.bf16 %v41
    %v43 = vsub.f32 %v40, %v42
    %v44 = vmul.f32 %v43, %v36
    %v45 = vld [vmem:[%s2] sm:$0x1]
    %v46 = vunpack.c.l.bf16 %v45
    %v47 = vld [vmem:[%s4] sm:$0x1]
    %v48 = vunpack.c.l.bf16 %v47
    %v49 = vsub.f32 %v46, %v48
    %v50 = vmul.f32 %v49, %v38
    %v51 = vld [vmem:[#allocation2] sm:$0x3]
    %vm52 = vcmask 58368
    %v53 = vsel %vm52, %v44, 0.0
    %54 = vadd.xlane.f32.xlu0 %v53
    %v55 = vpop.xlane.xlu0 %54
    %v56 = vadd.f32 %v51, %v55
    %vm57 = vcmask 1024
    %58 = vst.msk [vmem:[#allocation2] sm:$0x3] %vm57, %v56
    %v59 = vld [vmem:[#allocation3] sm:$0x3]
    %v60 = vsel %vm52, %v50, 0.0
    %61 = vadd.xlane.f32.xlu0 %v60
    %v62 = vpop.xlane.xlu0 %61
    %v63 = vadd.f32 %v59, %v62
    %64 = vst.msk [vmem:[#allocation3] sm:$0x3] %vm57, %v63
    // Predicated region
    $region34: #{tpu_custom_call.1} parent=1 // pred_check
      %p65 = pneg %p28
    $region35: #{tpu_custom_call.1} parent=1 // pred_check_branch
      %67 = sbr.rel (%p65) target = $region37
    $region36: #{tpu_custom_call.1} parent=1 // pred_region
      %s68 = sld [smem:[#allocation4]]
      %v69 = vld [vmem:[#allocation2] sm:$0x3]
      %v70 = vld [vmem:[#allocation3] sm:$0x3]
      %v71 = vsub.f32 %v69, %v70
      %s72 = ssub.f32 0.0, %s68
      %v73 = vstv %s72
      %v74 = vmul.f32 %v73, %v71
      %v75 = vmax.f32 %v74, 0.0
      %v76 = vand.u32 2147483647, %v74
      %v77 = vsub.f32 0.0, %v76
      %v78 = vmul.f32 %v77, 1.442695
      %v79 = vpow.pop %v78
      %v80 = vadd.f32 %v79, 1.0
      %v81 = vlog2.pop %v80
      %v82 = vmul.f32 %v81, 0.6931472
      %v83 = vmul.f32 -0.5, %v79
      %v84 = vadd.f32 %v83, 1.0
      %v85 = vmul.f32 %v84, %v79
      %v86 = vand.u32 2147483647, %v79
      %vm87 = vcmp.lt.f32.partialorder %v86, 0.0004427343
      %v88 = vsel %vm87, %v85, %v82
      %v89 = vadd.f32 %v75, %v88
      %v90 = vstv %s68
      %v91 = vmul.f32 %v90, %v69
      %v92 = vmul.f32 %v90, %v70
      %94 = vrot.lane.b32.xlu0 %v91, 1
      %v95 = vpop.permute.xlu0 %94
      %98 = vrot.lane.b32.xlu0 %v92, 2
      %v99 = vpop.permute.xlu0 %98
      %vm101 = vcmask 7168
      %v102 = vsel %vm101, %v89, %v95
      %vm103 = vcmask 15360
      %v104 = vsel %vm103, %v102, %v99
      %vm105 = vcmask 23552
      %v106 = vsel %vm105, %v104, 0.0
      %107 = vst.msk [vmem:[#allocation5] sm:$0x3] %vm52, %v106
    $region37: #{tpu_custom_call.1} parent=1 // pred_fallthru
      _
    // Predicated region
    $region38: #{tpu_custom_call.1} parent=1 // pred_check
      _
    $region39: #{tpu_custom_call.1} parent=1 // pred_check_branch
      %109 = sbr.rel (0) target = $region41
    $region40: #{tpu_custom_call.1} parent=1 // pred_region
      %s111 = ssub.s32 32, 32
      %112 = vsyncadd [#allocation6], %s111
      %s114 = sshll.u32 [#allocation5], 4
      %s115 = int_to_ptr.vmem [resolvable:$true] %s114
      %117 = dma.vmem_to_hbm [thread:$0]  %s115, 32, %s7, [#allocation6]
    $region41: #{tpu_custom_call.1} parent=1 // pred_fallthru
      _
    // Predicated region
    $region42: #{tpu_custom_call.1} parent=1 // pred_check
      _
    $region43: #{tpu_custom_call.1} parent=1 // pred_check_branch
      %119 = sbr.rel (0) target = $region45
    $region44: #{tpu_custom_call.1} parent=1 // pred_region
      %120 = dma.done [#allocation6], 32
    $region45: #{tpu_custom_call.1} parent=1 // pred_fallthru
      _
    %121 = vsyncpa [#allocation6], 1

</llo_original>
